<compile_context>
chip_gen: v7x
topology: tpu7x:2x2x1
jax: 0.10.0
libtpu: 0.0.40
codegen_flags: <defaults>
</compile_context>

<pallas_src>
import jax
import jax.numpy as jnp
from jax import lax
from jax.experimental import pallas as pl
from jax.experimental.pallas import tpu as pltpu

NUM_FEATURES = 100
FEAT_PAD = 128          # lin1 contraction dim padded so the MXU K dim fills lanes
HIDDEN = 32
NUM_CLASSES = 2
CLASS_PAD = 128         # lane-dense output stores; slice [:, :2] outside
NEG_INF = -1e30


def _round_up(a, b):
    return (a + b - 1) // b * b


def _choose_tiles(n):
    """Return (n_pad, tq, tk): padded node count and attention tile sizes."""
    n_pad = _round_up(max(n, 8), 128)
    if n_pad <= 512:
        tq = min(128, n_pad)
        tk = n_pad                      # single kv block
    else:
        n_pad = _round_up(n_pad, 512)
        tq = 256                        # (tq, tk) bf16 bias block = 256 KiB
        tk = 512
    return n_pad, tq, tk


def _vmem_limit(byte_estimate):
    # Raise the scoped cap (v5e default 16 MiB) but never above v7x's 64 MiB.
    return int(min(max(2 * byte_estimate, 16 << 20), 64 << 20))


# ---------------------------------------------------------------------------
# Stage 1 (row-tiled prologue):
#   h = relu(x @ w1 + b1);  q = beta * normalize(h);  k = normalize(h);  v = h
# ---------------------------------------------------------------------------
def lin1_norm_kernel(beta_ref, x_ref, w1_ref, b1_ref, q_ref, k_ref, v_ref):
    # dropout (eval mode) is identity.
    h = jnp.dot(x_ref[...], w1_ref[...],               # bf16 x bf16 -> f32 acc (MXU)
                preferred_element_type=jnp.float32) + b1_ref[...]
    h = jnp.maximum(h, 0.0)                            # (TR, 32) f32
    sq = jnp.sum(h * h, axis=-1, keepdims=True)
    hn = h * lax.rsqrt(jnp.maximum(sq, 1e-24))         # EUP rsqrt == h / max(||h||,1e-12)
    q_ref[...] = (beta_ref[0, 0] * hn).astype(jnp.bfloat16)   # beta folded into q
    k_ref[...] = hn.astype(jnp.bfloat16)
    v_ref[...] = h.astype(jnp.bfloat16)


# ---------------------------------------------------------------------------
# Stage 2: flash-style AGNN attention (online softmax over kv blocks),
#          then lin2 + log_softmax at the last kv step.
# ---------------------------------------------------------------------------
def agnn_attn_kernel(q_ref, k_ref, v_ref, bias_ref, w2_ref, b2_ref, out_ref,
                     m_sc, l_sc, acc_sc):
    ki = pl.program_id(1)

    @pl.when(ki == 0)
    def _():
        m_sc[...] = jnp.full(m_sc.shape, -jnp.inf, jnp.float32)
        l_sc[...] = jnp.zeros(l_sc.shape, jnp.float32)
        acc_sc[...] = jnp.zeros(acc_sc.shape, jnp.float32)

    # s = (beta * hn_q) @ hn_k^T : bf16 operands, f32 accumulation, contract
    # last dims of both operands (no materialized transpose).
    s = lax.dot_general(q_ref[...], k_ref[...], (((1,), (1,)), ((), ())),
                        preferred_element_type=jnp.float32)        # (TQ, TK)
    logits = s + bias_ref[...].astype(jnp.float32)                  # additive edge mask

    m_new = jnp.maximum(m_sc[...], jnp.max(logits, axis=-1, keepdims=True))
    a = jnp.exp(m_sc[...] - m_new)
    p = jnp.exp(logits - m_new)
    l_sc[...] = a * l_sc[...] + jnp.sum(p, axis=-1, keepdims=True)
    acc_sc[...] = a * acc_sc[...] + jnp.dot(p.astype(jnp.bfloat16), v_ref[...],
                                            preferred_element_type=jnp.float32)
    m_sc[...] = m_new

    @pl.when(ki == pl.num_programs(1) - 1)
    def _():
        # alpha @ h, normalized with an approx reciprocal (EUP slot).
        h2 = acc_sc[...] * pl.reciprocal(l_sc[...], approx=True)    # (TQ, 32)
        # dropout (eval) identity; lin2 with class dim padded to 128:
        # padded weight cols are 0, padded biases -1e30 -> vanish in log_softmax.
        z = jnp.dot(h2, w2_ref[...], preferred_element_type=jnp.float32) + b2_ref[...]
        zm = jnp.max(z, axis=-1, keepdims=True)
        zc = z - zm
        lse = jnp.log(jnp.sum(jnp.exp(zc), axis=-1, keepdims=True))
        out_ref[...] = zc - lse


def net_forward(x, w1, b1, w2, b2, adj, beta):
    n = x.shape[0]
    n_pad, tq, tk = _choose_tiles(n)

    # Lane-padded, bf16 MXU operands (zero-padding keeps the matmuls exact).
    x_p = jnp.pad(x, ((0, n_pad - n), (0, FEAT_PAD - NUM_FEATURES))).astype(jnp.bfloat16)
    w1_p = jnp.pad(w1, ((0, FEAT_PAD - NUM_FEATURES), (0, 0))).astype(jnp.bfloat16)
    w2_p = jnp.pad(w2, ((0, 0), (0, CLASS_PAD - NUM_CLASSES)))
    b2_p = jnp.pad(b2, ((0, 0), (0, CLASS_PAD - NUM_CLASSES)), constant_values=NEG_INF)

    # Additive edge mask in bf16 (halves the only O(N^2) HBM stream).
    # Padded key columns are fully masked; padded query rows are sliced off.
    bias = jnp.full((n_pad, n_pad), NEG_INF, jnp.float32)
    bias = bias.at[:n, :n].set(jnp.where(adj > 0.0, 0.0, NEG_INF))
    bias = bias.astype(jnp.bfloat16)

    smem = pl.BlockSpec(memory_space=pltpu.MemorySpace.SMEM)

    # ---------------- stage 1: lin1 + ReLU + normalize (row-tiled) ----------------
    tr = tq
    s1_bytes = (2 * (tr * FEAT_PAD * 2 + FEAT_PAD * HIDDEN * 2 + HIDDEN * 4
                     + 3 * tr * HIDDEN * 2)
                + 4 * tr * HIDDEN * 4)
    qkv_shape = jax.ShapeDtypeStruct((n_pad, HIDDEN), jnp.bfloat16)
    q_a, k_a, v_a = pl.pallas_call(
        lin1_norm_kernel,
        out_shape=(qkv_shape, qkv_shape, qkv_shape),
        grid_spec=pltpu.PrefetchScalarGridSpec(
            num_scalar_prefetch=0,
            grid=(n_pad // tr,),
            in_specs=[
                smem,                                                  # beta (1,1)
                pl.BlockSpec((tr, FEAT_PAD), lambda i: (i, 0)),        # x
                pl.BlockSpec((FEAT_PAD, HIDDEN), lambda i: (0, 0)),    # w1
                pl.BlockSpec((1, HIDDEN), lambda i: (0, 0)),           # b1
            ],
            out_specs=[pl.BlockSpec((tr, HIDDEN), lambda i: (i, 0))] * 3,
        ),
        compiler_params=pltpu.CompilerParams(
            dimension_semantics=("parallel",),
            vmem_limit_bytes=_vmem_limit(s1_bytes)),
    )(beta, x_p, w1_p, b1)

    # ---------------- stage 2: tiled AGNN attention + lin2 + log_softmax ----------
    grid = (n_pad // tq, n_pad // tk)
    s2_bytes = (2 * (tq * HIDDEN * 2 + 2 * tk * HIDDEN * 2 + tq * tk * 2
                     + HIDDEN * CLASS_PAD * 4 + CLASS_PAD * 4
                     + tq * CLASS_PAD * 4)
                + (2 * tq + tq * HIDDEN) * 4
                + 4 * tq * tk * 4)                       # s / logits / p temporaries

    flops = 2 * n_pad * n_pad * HIDDEN * 2 + 2 * n_pad * HIDDEN * CLASS_PAD
    transcendentals = n_pad * n_pad + n_pad * CLASS_PAD + 3 * n_pad
    bytes_accessed = (q_a.size + k_a.size + v_a.size + bias.size) * 2 \
        + (w2_p.size + b2_p.size) * 4 + n_pad * CLASS_PAD * 4

    out_pad = pl.pallas_call(
        agnn_attn_kernel,
        out_shape=jax.ShapeDtypeStruct((n_pad, CLASS_PAD), jnp.float32),
        grid_spec=pltpu.PrefetchScalarGridSpec(
            num_scalar_prefetch=0,
            grid=grid,
            in_specs=[
                pl.BlockSpec((tq, HIDDEN), lambda qi, ki: (qi, 0)),        # q (bf16)
                pl.BlockSpec((tk, HIDDEN), lambda qi, ki: (ki, 0)),        # k (bf16)
                pl.BlockSpec((tk, HIDDEN), lambda qi, ki: (ki, 0)),        # v (bf16)
                pl.BlockSpec((tq, tk), lambda qi, ki: (qi, ki)),           # bias (bf16)
                pl.BlockSpec((HIDDEN, CLASS_PAD), lambda qi, ki: (0, 0)),  # w2
                pl.BlockSpec((1, CLASS_PAD), lambda qi, ki: (0, 0)),       # b2
            ],
            out_specs=pl.BlockSpec((tq, CLASS_PAD), lambda qi, ki: (qi, 0)),
            scratch_shapes=[
                pltpu.VMEM((tq, 1), jnp.float32),       # running max m
                pltpu.VMEM((tq, 1), jnp.float32),       # running denom l
                pltpu.VMEM((tq, HIDDEN), jnp.float32),  # running numerator acc
            ],
        ),
        compiler_params=pltpu.CompilerParams(
            dimension_semantics=("parallel", "arbitrary"),
            vmem_limit_bytes=_vmem_limit(s2_bytes)),
        cost_estimate=pl.CostEstimate(flops=flops,
                                      transcendentals=transcendentals,
                                      bytes_accessed=bytes_accessed),
    )(q_a, k_a, v_a, bias, w2_p, b2_p)

    # Padded rows / padded class columns are garbage / ~-1e30; slice outside.
    return out_pad[:n, :NUM_CLASSES]


def build_adjacency(edge_index, num_nodes):
    """Dense mask: adj[i, j] = 1 if edge j->i exists (plus self loops)."""
    src, dst = edge_index[0], edge_index[1]
    adj = jnp.zeros((num_nodes, num_nodes), jnp.float32)
    adj = adj.at[dst, src].set(1.0)
    # AGNNConv(add_self_loops=True): remove existing self loops, then add them.
    adj = jnp.where(jnp.eye(num_nodes, dtype=bool), 1.0, adj)
    return adj


def reference_forward(x, w1, b1, w2, b2, adj, beta):
    h = jnp.maximum(x @ w1 + b1, 0.0)
    hn = h / jnp.maximum(jnp.linalg.norm(h, axis=-1, keepdims=True), 1e-12)
    s = hn @ hn.T
    logits = jnp.where(adj > 0.0, beta[0, 0] * s, NEG_INF)
    alpha = jax.nn.softmax(logits, axis=-1)
    h2 = alpha @ h
    z = h2 @ w2 + b2
    return jax.nn.log_softmax(z, axis=1)


if __name__ == "__main__":
    key = jax.random.PRNGKey(0)
    k_x, k_w1, k_b1, k_w2, k_b2, k_src, k_dst = jax.random.split(key, 7)

    N = 16          # number of graph nodes
    E = 48          # number of directed edges

    # Node features and deterministic parameter init (synthetic, not a checkpoint).
    x = jax.random.normal(k_x, (N, NUM_FEATURES), jnp.float32)
    w1 = jax.random.normal(k_w1, (NUM_FEATURES, HIDDEN), jnp.float32) * 0.1
    b1 = jax.random.normal(k_b1, (1, HIDDEN), jnp.float32) * 0.1
    w2 = jax.random.normal(k_w2, (HIDDEN, NUM_CLASSES), jnp.float32) * 0.1
    b2 = jax.random.normal(k_b2, (1, NUM_CLASSES), jnp.float32) * 0.1
    beta = jnp.ones((1, 1), jnp.float32)   # AGNNConv beta initialized to 1.0

    # Random edge_index (2, E), PyG convention: row 0 = source, row 1 = target.
    src = jax.random.randint(k_src, (E,), 0, N)
    dst = jax.random.randint(k_dst, (E,), 0, N)
    edge_index = jnp.stack([src, dst], axis=0)
    adj = build_adjacency(edge_index, N)

    out = net_forward(x, w1, b1, w2, b2, adj, beta)
    out = jax.block_until_ready(out)

    ref = reference_forward(x, w1, b1, w2, b2, adj, beta)
    assert out.shape == (N, NUM_CLASSES)
    # bf16 MXU operands + approx EUP reciprocal/rsqrt vs a pure-f32 reference:
    # allow ~1e-2 slack.
    assert jnp.allclose(out, ref, atol=2e-2, rtol=2e-2), \
        float(jnp.max(jnp.abs(out - ref)))
    # rows of log_softmax must exp-sum to 1 regardless of numeric path.
    assert jnp.allclose(jnp.sum(jnp.exp(out), axis=1), 1.0, atol=1e-4)

    print("KERNEL_OK")
</pallas_src>

<mosaic_0001>
module attributes {stable_mosaic.version = 11 : i64} {
  func.func @lin1_norm_kernel(%arg0: i32, %arg1: memref<1x1xf32, #tpu.memory_space<smem>>, %arg2: memref<128x128xbf16, #tpu.memory_space<vmem>>, %arg3: memref<128x32xbf16, #tpu.memory_space<vmem>>, %arg4: memref<1x32xf32, #tpu.memory_space<vmem>>, %arg5: memref<128x32xbf16, #tpu.memory_space<vmem>>, %arg6: memref<128x32xbf16, #tpu.memory_space<vmem>>, %arg7: memref<128x32xbf16, #tpu.memory_space<vmem>>) attributes {dimension_semantics = [#tpu.dimension_semantics<parallel>], iteration_bounds = array<i64: 1>, scalar_prefetch = 0 : i64, scratch_operands = 0 : i64, tpu.core_type = #tpu.core_type<tc>, window_params = [{transform_indices = @transform_0, window_bounds = array<i64: 1, 1>}, {transform_indices = @transform_1, window_bounds = array<i64: 128, 128>}, {pipeline_mode = #tpu.pipeline_mode<synchronous>, transform_indices = @transform_2, window_bounds = array<i64: 128, 32>}, {pipeline_mode = #tpu.pipeline_mode<synchronous>, transform_indices = @transform_3, window_bounds = array<i64: 1, 32>}, {transform_indices = @transform_4, window_bounds = array<i64: 128, 32>}, {transform_indices = @transform_5, window_bounds = array<i64: 128, 32>}, {transform_indices = @transform_6, window_bounds = array<i64: 128, 32>}]} {
    %c0 = arith.constant 0 : index
    %c0_0 = arith.constant 0 : index
    %0 = vector.load %arg2[%c0, %c0_0] : memref<128x128xbf16, #tpu.memory_space<vmem>>, vector<128x128xbf16>
    %c0_1 = arith.constant 0 : index
    %c0_2 = arith.constant 0 : index
    %1 = vector.load %arg3[%c0_1, %c0_2] : memref<128x32xbf16, #tpu.memory_space<vmem>>, vector<128x32xbf16>
    %cst = arith.constant dense<0.000000e+00> : vector<128x32xf32>
    %2 = tpu.matmul %0, %1, %cst {dimension_numbers = #tpu.dot_dimension_numbers<[1], [0], [0], [1], [0, 0, 1, 1], [], []>} : vector<128x128xbf16>, vector<128x32xbf16>, vector<128x32xf32> -> vector<128x32xf32>
    %c0_3 = arith.constant 0 : index
    %c0_4 = arith.constant 0 : index
    %3 = vector.load %arg4[%c0_3, %c0_4] : memref<1x32xf32, #tpu.memory_space<vmem>>, vector<1x32xf32>
    %4 = vector.broadcast %3 : vector<1x32xf32> to vector<128x32xf32>
    %5 = arith.addf %2, %4 : vector<128x32xf32>
    %cst_5 = arith.constant 0.000000e+00 : f32
    %6 = vector.broadcast %cst_5 : f32 to vector<128x32xf32>
    %7 = arith.maximumf %5, %6 : vector<128x32xf32>
    %8 = arith.mulf %7, %7 : vector<128x32xf32>
    %cst_6 = arith.constant dense<0.000000e+00> : vector<128xf32>
    %9 = vector.multi_reduction <add>, %8, %cst_6 [1] : vector<128x32xf32> to vector<128xf32>
    %10 = vector.shape_cast %9 : vector<128xf32> to vector<128x1xf32>
    %cst_7 = arith.constant 1.000000e-24 : f32
    %11 = vector.broadcast %cst_7 : f32 to vector<128x1xf32>
    %12 = arith.maximumf %10, %11 : vector<128x1xf32>
    %13 = math.rsqrt %12 : vector<128x1xf32>
    %14 = vector.broadcast %13 : vector<128x1xf32> to vector<128x32xf32>
    %15 = arith.mulf %7, %14 : vector<128x32xf32>
    %c0_8 = arith.constant 0 : index
    %c0_9 = arith.constant 0 : index
    %16 = memref.load %arg1[%c0_8, %c0_9] : memref<1x1xf32, #tpu.memory_space<smem>>
    %17 = vector.broadcast %16 : f32 to vector<128x32xf32>
    %18 = arith.mulf %17, %15 : vector<128x32xf32>
    %19 = arith.truncf %18 : vector<128x32xf32> to vector<128x32xbf16>
    %c0_10 = arith.constant 0 : index
    %c0_11 = arith.constant 0 : index
    %20 = vector.load %arg5[%c0_10, %c0_11] : memref<128x32xbf16, #tpu.memory_space<vmem>>, vector<128x32xbf16>
    tpu.vector_store %arg5[%c0_10, %c0_11], %19 {strides = array<i32>} : memref<128x32xbf16, #tpu.memory_space<vmem>>, vector<128x32xbf16>,
    %21 = arith.truncf %15 : vector<128x32xf32> to vector<128x32xbf16>
    %c0_12 = arith.constant 0 : index
    %c0_13 = arith.constant 0 : index
    %22 = vector.load %arg6[%c0_12, %c0_13] : memref<128x32xbf16, #tpu.memory_space<vmem>>, vector<128x32xbf16>
    tpu.vector_store %arg6[%c0_12, %c0_13], %21 {strides = array<i32>} : memref<128x32xbf16, #tpu.memory_space<vmem>>, vector<128x32xbf16>,
    %23 = arith.truncf %7 : vector<128x32xf32> to vector<128x32xbf16>
    %c0_14 = arith.constant 0 : index
    %c0_15 = arith.constant 0 : index
    %24 = vector.load %arg7[%c0_14, %c0_15] : memref<128x32xbf16, #tpu.memory_space<vmem>>, vector<128x32xbf16>
    tpu.vector_store %arg7[%c0_14, %c0_15], %23 {strides = array<i32>} : memref<128x32xbf16, #tpu.memory_space<vmem>>, vector<128x32xbf16>,
    return
  }
  func.func @transform_0(%arg0: i32) -> (i32, i32) {
    %c0_i32 = arith.constant 0 : i32
    %c0_i32_0 = arith.constant 0 : i32
    %c0_i32_1 = arith.constant 0 : i32
    return %c0_i32, %c0_i32_0 : i32, i32
  }
  func.func @transform_1(%arg0: i32) -> (i32, i32) {
    %c0_i32 = arith.constant 0 : i32
    %c0_i32_0 = arith.constant 0 : i32
    return %arg0, %c0_i32 : i32, i32
  }
  func.func @transform_2(%arg0: i32) -> (i32, i32) {
    %c0_i32 = arith.constant 0 : i32
    %c0_i32_0 = arith.constant 0 : i32
    %c0_i32_1 = arith.constant 0 : i32
    return %c0_i32, %c0_i32_0 : i32, i32
  }
  func.func @transform_3(%arg0: i32) -> (i32, i32) {
    %c0_i32 = arith.constant 0 : i32
    %c0_i32_0 = arith.constant 0 : i32
    %c0_i32_1 = arith.constant 0 : i32
    return %c0_i32, %c0_i32_0 : i32, i32
  }
  func.func @transform_4(%arg0: i32) -> (i32, i32) {
    %c0_i32 = arith.constant 0 : i32
    %c0_i32_0 = arith.constant 0 : i32
    return %arg0, %c0_i32 : i32, i32
  }
  func.func @transform_5(%arg0: i32) -> (i32, i32) {
    %c0_i32 = arith.constant 0 : i32
    %c0_i32_0 = arith.constant 0 : i32
    return %arg0, %c0_i32 : i32, i32
  }
  func.func @transform_6(%arg0: i32) -> (i32, i32) {
    %c0_i32 = arith.constant 0 : i32
    %c0_i32_0 = arith.constant 0 : i32
    return %arg0, %c0_i32 : i32, i32
  }
}

</mosaic_0001>

<llo_original>
// kernel: tpu_custom_call.1
$region0: #{tpu_custom_call.1}
  #allocation0 [shape = 'u32[]', space=smem, size = 0x4, offset = 0x4, fixed_abs, tag = 'smem constant byte address 0x4 - core index']
  #allocation1 [shape = 'u32[144,128]{1,0:T(1,128)}', space=vmem, size = 0x12000, scoped, tag = 'internal scratch']
  #allocation2 [shape = 'f32[1,1]{1,0:T(1,128)S(6)}', space=smem, size = 0x200, scoped, tag = 'scoped memory for tpu_custom_call.1']
  %s0 = inlined_call_operand.<no memory space> [shape: f32[1,1], index: 0, kind: input, shape index: {}]
  %s1 = inlined_call_operand.vmem [shape: bf16[128,128], index: 1, kind: input, shape index: {}]
  %s2 = inlined_call_operand.vmem [shape: bf16[128,32], index: 2, kind: input, shape index: {}]
  %s3 = inlined_call_operand.vmem [shape: f32[1,32], index: 3, kind: input, shape index: {}]
  %s4 = inlined_call_operand.vmem [shape: bf16[128,32], index: 4, kind: output, shape index: {0}]
  %s5 = inlined_call_operand.vmem [shape: bf16[128,32], index: 5, kind: output, shape index: {1}]
  %s6 = inlined_call_operand.vmem [shape: bf16[128,32], index: 6, kind: output, shape index: {2}]
  %7 = xla_tuple %s4, %s5, %s6
  %s8 = sld [smem:[#allocation0]]
  $region42: #{tpu_custom_call.1} parent=0
    _
  %s10 = ssub.s32 1, %s8
  %s11 = scalar_select 0, %s10, %s8
  %12 = sst [smem:[#allocation2]] %s0
  // Predicated region
  $region2: #{tpu_custom_call.1} parent=0 // pred_check
    _
  $region3: #{tpu_custom_call.1} parent=0 // pred_check_branch
    %14 = sbr.rel (0) target = $region5
  $region4: #{tpu_custom_call.1} parent=0 // pred_region
    _
  $region5: #{tpu_custom_call.1} parent=0 // pred_fallthru
    _
  // Predicated region
  $region6: #{tpu_custom_call.1} parent=0 // pred_check
    _
  $region7: #{tpu_custom_call.1} parent=0 // pred_check_branch
    %16 = sbr.rel (0) target = $region9
  $region8: #{tpu_custom_call.1} parent=0 // pred_region
    _
  $region9: #{tpu_custom_call.1} parent=0 // pred_fallthru
    _
  // Predicated region
  $region10: #{tpu_custom_call.1} parent=0 // pred_check
    _
  $region11: #{tpu_custom_call.1} parent=0 // pred_check_branch
    %18 = sbr.rel (0) target = $region13
  $region12: #{tpu_custom_call.1} parent=0 // pred_region
    _
  $region13: #{tpu_custom_call.1} parent=0 // pred_fallthru
    _
  // Predicated region
  $region14: #{tpu_custom_call.1} parent=0 // pred_check
    _
  $region15: #{tpu_custom_call.1} parent=0 // pred_check_branch
    %20 = sbr.rel (0) target = $region17
  $region16: #{tpu_custom_call.1} parent=0 // pred_region
    _
  $region17: #{tpu_custom_call.1} parent=0 // pred_fallthru
    _
  %v22 = vld [vmem:[%s1] sm:$0xf]
  %v23 = vld [vmem:[%s1 + $0x4] sm:$0xf]
  %v24 = vld [vmem:[%s1 + $0x8] sm:$0xf]
  %v25 = vld [vmem:[%s1 + $0xc] sm:$0xf]
  %v26 = vld [vmem:[%s1 + $0x10] sm:$0xf]
  %v27 = vld [vmem:[%s1 + $0x14] sm:$0xf]
  %v28 = vld [vmem:[%s1 + $0x18] sm:$0xf]
  %v29 = vld [vmem:[%s1 + $0x1c] sm:$0xf]
  %v30 = vld [vmem:[%s1 + $0x20] sm:$0xf]
  %v31 = vld [vmem:[%s1 + $0x24] sm:$0xf]
  %v32 = vld [vmem:[%s1 + $0x28] sm:$0xf]
  %v33 = vld [vmem:[%s1 + $0x2c] sm:$0xf]
  %v34 = vld [vmem:[%s1 + $0x30] sm:$0xf]
  %v35 = vld [vmem:[%s1 + $0x34] sm:$0xf]
  %v36 = vld [vmem:[%s1 + $0x38] sm:$0xf]
  %v37 = vld [vmem:[%s1 + $0x3c] sm:$0xf]
  %v38 = vld [vmem:[%s2] sm:$0xf]
  %v39 = vld [vmem:[%s2 + $0x4] sm:$0xf]
  %v40 = vld [vmem:[%s2 + $0x8] sm:$0xf]
  %v41 = vld [vmem:[%s2 + $0xc] sm:$0xf]
  %v42 = vld [vmem:[%s2 + $0x10] sm:$0xf]
  %v43 = vld [vmem:[%s2 + $0x14] sm:$0xf]
  %v44 = vld [vmem:[%s2 + $0x18] sm:$0xf]
  %v45 = vld [vmem:[%s2 + $0x1c] sm:$0xf]
  %v46 = vld [vmem:[%s2 + $0x20] sm:$0xf]
  %v47 = vld [vmem:[%s2 + $0x24] sm:$0xf]
  %v48 = vld [vmem:[%s2 + $0x28] sm:$0xf]
  %v49 = vld [vmem:[%s2 + $0x2c] sm:$0xf]
  %v50 = vld [vmem:[%s2 + $0x30] sm:$0xf]
  %v51 = vld [vmem:[%s2 + $0x34] sm:$0xf]
  %v52 = vld [vmem:[%s2 + $0x38] sm:$0xf]
  %v53 = vld [vmem:[%s2 + $0x3c] sm:$0xf]
  %v54 = vld [vmem:[%s3] sm:$0x1]
  %v56 = vlaneseq
  %v57 = vshrl.u32 %v56, 7
  %v58 = vsub.s32 0, %v57
  %v59 = vrot.slane %v54, %v58
  %v77 = vunpack.c.l.b16 %v22
  %v78 = vunpack.c.l.b16 %v23
  %v79 = vunpack.c.l.b16 %v24
  %v80 = vunpack.c.l.b16 %v25
  %v81 = vunpack.c.l.b16 %v26
  %v82 = vunpack.c.l.b16 %v27
  %v83 = vunpack.c.l.b16 %v28
  %v84 = vunpack.c.l.b16 %v29
  %v85 = vunpack.c.l.b16 %v30
  %v86 = vunpack.c.l.b16 %v31
  %v87 = vunpack.c.l.b16 %v32
  %v88 = vunpack.c.l.b16 %v33
  %v89 = vunpack.c.l.b16 %v34
  %v90 = vunpack.c.l.b16 %v35
  %v91 = vunpack.c.l.b16 %v36
  %v92 = vunpack.c.l.b16 %v37
  %v93 = vpack.c.b16 %v78, %v77
  %v94 = vpack.c.b16 %v80, %v79
  %v95 = vpack.c.b16 %v82, %v81
  %v96 = vpack.c.b16 %v84, %v83
  %v97 = vpack.c.b16 %v86, %v85
  %v98 = vpack.c.b16 %v88, %v87
  %v99 = vpack.c.b16 %v90, %v89
  %v100 = vpack.c.b16 %v92, %v91
  %v125 = vunpack.c.l.b16 %v38
  %v126 = vunpack.c.l.b16 %v39
  %v127 = vunpack.c.l.b16 %v40
  %v128 = vunpack.c.l.b16 %v41
  %v129 = vunpack.c.l.b16 %v42
  %v130 = vunpack.c.l.b16 %v43
  %v131 = vunpack.c.l.b16 %v44
  %v132 = vunpack.c.l.b16 %v45
  %v133 = vunpack.c.l.b16 %v46
  %v134 = vunpack.c.l.b16 %v47
  %v135 = vunpack.c.l.b16 %v48
  %v136 = vunpack.c.l.b16 %v49
  %v137 = vunpack.c.l.b16 %v50
  %v138 = vunpack.c.l.b16 %v51
  %v139 = vunpack.c.l.b16 %v52
  %v140 = vunpack.c.l.b16 %v53
  %v141 = vpack.c.b16 %v126, %v125
  %v142 = vpack.c.b16 %v128, %v127
  %v143 = vpack.c.b16 %v130, %v129
  %v144 = vpack.c.b16 %v132, %v131
  %v145 = vpack.c.b16 %v134, %v133
  %v146 = vpack.c.b16 %v136, %v135
  %v147 = vpack.c.b16 %v138, %v137
  %v148 = vpack.c.b16 %v140, %v139
  %157 = vmatprep.subr.bf16.mxu0 0
  %158 = vmatpush1.bf16.msra.mxu0 %v141
  %159 = vmatprep.subr.bf16.mxu0 0
  %160 = vmatpush1.bf16.msra.mxu0 %v142
  %161 = vmatprep.subr.bf16.mxu0 0
  %162 = vmatpush1.bf16.msra.mxu0 %v143
  %163 = vmatprep.subr.bf16.mxu0 0
  %164 = vmatpush1.bf16.msra.mxu0 %v144
  %165 = vmatprep.subr.bf16.mxu0 0
  %166 = vmatpush1.bf16.msra.mxu0 %v145
  %167 = vmatprep.subr.bf16.mxu0 0
  %168 = vmatpush1.bf16.msra.mxu0 %v146
  %169 = vmatprep.subr.bf16.mxu0 0
  %170 = vmatpush1.bf16.msra.mxu0 %v147
  %171 = vmatprep.subr.bf16.mxu0 0
  %172 = vmatpush1.bf16.msra.mxu0 %v148
  %173 = vmatprep.subr.bf16.mxu0 0
  %174 = vmatpush1.bf16.msra.mxu0 0
  %175 = vmatprep.subr.bf16.mxu0 0
  %176 = vmatpush1.bf16.msra.mxu0 0
  %177 = vmatprep.subr.bf16.mxu0 0
  %178 = vmatpush1.bf16.msra.mxu0 0
  %179 = vmatprep.subr.bf16.mxu0 0
  %180 = vmatpush1.bf16.msra.mxu0 0
  %181 = vmatprep.subr.bf16.mxu0 0
  %182 = vmatpush1.bf16.msra.mxu0 0
  %183 = vmatprep.subr.bf16.mxu0 0
  %184 = vmatpush1.bf16.msra.mxu0 0
  %185 = vmatprep.subr.bf16.mxu0 0
  %186 = vmatpush1.bf16.msra.mxu0 0
  %187 = vmatprep.subr.bf16.mxu0 0
  %188 = vmatpush1.bf16.msra.mxu0 0
  %189 = vmatprep.mubr.bf16.mxu0 0
  %190 = vmatmul.mubr.bf16.gmra.mrb[0].mxu0 %v93
  %v191 = vpop.f32.mrb[0].mxu0
  %v192 = vadd.f32 %v59, %v191
  %v193 = vpop.f32.mrb[0].mxu0
  %v194 = vpop.f32.mrb[0].mxu0
  %v195 = vadd.f32 %v59, %v194
  %v196 = vpop.f32.mrb[0].mxu0
  %197 = vmatprep.mubr.bf16.mxu0 0
  %198 = vmatmul.mubr.bf16.gmra.mrb[0].mxu0 %v94
  %v199 = vpop.f32.mrb[0].mxu0
  %v200 = vadd.f32 %v59, %v199
  %v201 = vpop.f32.mrb[0].mxu0
  %v202 = vpop.f32.mrb[0].mxu0
  %v203 = vadd.f32 %v59, %v202
  %v204 = vpop.f32.mrb[0].mxu0
  %205 = vmatprep.mubr.bf16.mxu0 0
  %206 = vmatmul.mubr.bf16.gmra.mrb[0].mxu0 %v95
  %v207 = vpop.f32.mrb[0].mxu0
  %v208 = vadd.f32 %v59, %v207
  %v209 = vpop.f32.mrb[0].mxu0
  %v210 = vpop.f32.mrb[0].mxu0
  %v211 = vadd.f32 %v59, %v210
  %v212 = vpop.f32.mrb[0].mxu0
  %213 = vmatprep.mubr.bf16.mxu0 0
  %214 = vmatmul.mubr.bf16.gmra.mrb[0].mxu0 %v96
  %v215 = vpop.f32.mrb[0].mxu0
  %v216 = vadd.f32 %v59, %v215
  %v217 = vpop.f32.mrb[0].mxu0
  %v218 = vpop.f32.mrb[0].mxu0
  %v219 = vadd.f32 %v59, %v218
  %v220 = vpop.f32.mrb[0].mxu0
  %221 = vmatprep.mubr.bf16.mxu0 0
  %222 = vmatmul.mubr.bf16.gmra.mrb[0].mxu0 %v97
  %v223 = vpop.f32.mrb[0].mxu0
  %v224 = vadd.f32 %v59, %v223
  %v225 = vpop.f32.mrb[0].mxu0
  %v226 = vpop.f32.mrb[0].mxu0
  %v227 = vadd.f32 %v59, %v226
  %v228 = vpop.f32.mrb[0].mxu0
  %229 = vmatprep.mubr.bf16.mxu0 0
  %230 = vmatmul.mubr.bf16.gmra.mrb[0].mxu0 %v98
  %v231 = vpop.f32.mrb[0].mxu0
  %v232 = vadd.f32 %v59, %v231
  %v233 = vpop.f32.mrb[0].mxu0
  %v234 = vpop.f32.mrb[0].mxu0
  %v235 = vadd.f32 %v59, %v234
  %v236 = vpop.f32.mrb[0].mxu0
  %237 = vmatprep.mubr.bf16.mxu0 0
  %238 = vmatmul.mubr.bf16.gmra.mrb[0].mxu0 %v99
  %v239 = vpop.f32.mrb[0].mxu0
  %v240 = vadd.f32 %v59, %v239
  %v241 = vpop.f32.mrb[0].mxu0
  %v242 = vpop.f32.mrb[0].mxu0
  %v243 = vadd.f32 %v59, %v242
  %v244 = vpop.f32.mrb[0].mxu0
  %245 = vmatprep.mubr.bf16.mxu0 0
  %246 = vmatmul.mubr.bf16.gmra.mrb[0].mxu0 %v100
  %v247 = vpop.f32.mrb[0].mxu0
  %v248 = vadd.f32 %v59, %v247
  %v249 = vpop.f32.mrb[0].mxu0
  %v250 = vpop.f32.mrb[0].mxu0
  %v251 = vadd.f32 %v59, %v250
  %v252 = vpop.f32.mrb[0].mxu0
  %253 = vdwg.mxu0
  %v254 = vmax.f32 %v192, 0.0
  %v255 = vmax.f32 %v195, 0.0
  %v256 = vmax.f32 %v200, 0.0
  %v257 = vmax.f32 %v203, 0.0
  %v258 = vmax.f32 %v208, 0.0
  %v259 = vmax.f32 %v211, 0.0
  %v260 = vmax.f32 %v216, 0.0
  %v261 = vmax.f32 %v219, 0.0
  %v262 = vmax.f32 %v224, 0.0
  %v263 = vmax.f32 %v227, 0.0
  %v264 = vmax.f32 %v232, 0.0
  %v265 = vmax.f32 %v235, 0.0
  %v266 = vmax.f32 %v240, 0.0
  %v267 = vmax.f32 %v243, 0.0
  %v268 = vmax.f32 %v248, 0.0
  %v269 = vmax.f32 %v251, 0.0
  %v270 = vmul.f32 %v254, %v254
  %v271 = vmul.f32 %v255, %v255
  %v272 = vmul.f32 %v256, %v256
  %v273 = vmul.f32 %v257, %v257
  %v274 = vmul.f32 %v258, %v258
  %v275 = vmul.f32 %v259, %v259
  %v276 = vmul.f32 %v260, %v260
  %v277 = vmul.f32 %v261, %v261
  %v278 = vmul.f32 %v262, %v262
  %v279 = vmul.f32 %v263, %v263
  %v280 = vmul.f32 %v264, %v264
  %v281 = vmul.f32 %v265, %v265
  %v282 = vmul.f32 %v266, %v266
  %v283 = vmul.f32 %v267, %v267
  %v284 = vmul.f32 %v268, %v268
  %v285 = vmul.f32 %v269, %v269
  %vm286 = vcmask 261120
  %v287 = vsel %vm286, %v270, 0.0
  %288 = vadd.xlane.f32.xlu0 %v287
  %v289 = vpop.xlane.xlu0 %288
  %v290 = vsel %vm286, %v271, 0.0
  %291 = vadd.xlane.f32.xlu0 %v290
  %v292 = vpop.xlane.xlu0 %291
  %v293 = vsel %vm286, %v272, 0.0
  %294 = vadd.xlane.f32.xlu0 %v293
  %v295 = vpop.xlane.xlu0 %294
  %v296 = vsel %vm286, %v273, 0.0
  %297 = vadd.xlane.f32.xlu0 %v296
  %v298 = vpop.xlane.xlu0 %297
  %v299 = vsel %vm286, %v274, 0.0
  %300 = vadd.xlane.f32.xlu0 %v299
  %v301 = vpop.xlane.xlu0 %300
  %v302 = vsel %vm286, %v275, 0.0
  %303 = vadd.xlane.f32.xlu0 %v302
  %v304 = vpop.xlane.xlu0 %303
  %v305 = vsel %vm286, %v276, 0.0
  %306 = vadd.xlane.f32.xlu0 %v305
  %v307 = vpop.xlane.xlu0 %306
  %v308 = vsel %vm286, %v277, 0.0
  %309 = vadd.xlane.f32.xlu0 %v308
  %v310 = vpop.xlane.xlu0 %309
  %v311 = vsel %vm286, %v278, 0.0
  %312 = vadd.xlane.f32.xlu0 %v311
  %v313 = vpop.xlane.xlu0 %312
  %v314 = vsel %vm286, %v279, 0.0
  %315 = vadd.xlane.f32.xlu0 %v314
  %v316 = vpop.xlane.xlu0 %315
  %v317 = vsel %vm286, %v280, 0.0
  %318 = vadd.xlane.f32.xlu0 %v317
  %v319 = vpop.xlane.xlu0 %318
  %v320 = vsel %vm286, %v281, 0.0
  %321 = vadd.xlane.f32.xlu0 %v320
  %v322 = vpop.xlane.xlu0 %321
  %v323 = vsel %vm286, %v282, 0.0
  %324 = vadd.xlane.f32.xlu0 %v323
  %v325 = vpop.xlane.xlu0 %324
  %v326 = vsel %vm286, %v283, 0.0
  %327 = vadd.xlane.f32.xlu0 %v326
  %v328 = vpop.xlane.xlu0 %327
  %v329 = vsel %vm286, %v284, 0.0
  %330 = vadd.xlane.f32.xlu0 %v329
  %v331 = vpop.xlane.xlu0 %330
  %v332 = vsel %vm286, %v285, 0.0
  %333 = vadd.xlane.f32.xlu0 %v332
  %v334 = vpop.xlane.xlu0 %333
  %v335 = vmax.f32 %v289, 1e-24
  %v336 = vmax.f32 %v292, 1e-24
  %v337 = vmax.f32 %v295, 1e-24
  %v338 = vmax.f32 %v298, 1e-24
  %v339 = vmax.f32 %v301, 1e-24
  %v340 = vmax.f32 %v304, 1e-24
  %v341 = vmax.f32 %v307, 1e-24
  %v342 = vmax.f32 %v310, 1e-24
  %v343 = vmax.f32 %v313, 1e-24
  %v344 = vmax.f32 %v316, 1e-24
  %v345 = vmax.f32 %v319, 1e-24
  %v346 = vmax.f32 %v322, 1e-24
  %v347 = vmax.f32 %v325, 1e-24
  %v348 = vmax.f32 %v328, 1e-24
  %v349 = vmax.f32 %v331, 1e-24
  %v350 = vmax.f32 %v334, 1e-24
  %v351 = vrsqrt.pop %v335
  %v352 = vrsqrt.pop %v336
  %v353 = vrsqrt.pop %v337
  %v354 = vrsqrt.pop %v338
  %v355 = vrsqrt.pop %v339
  %v356 = vrsqrt.pop %v340
  %v357 = vrsqrt.pop %v341
  %v358 = vrsqrt.pop %v342
  %v359 = vrsqrt.pop %v343
  %v360 = vrsqrt.pop %v344
  %v361 = vrsqrt.pop %v345
  %v362 = vrsqrt.pop %v346
  %v363 = vrsqrt.pop %v347
  %v364 = vrsqrt.pop %v348
  %v365 = vrsqrt.pop %v349
  %v366 = vrsqrt.pop %v350
  %v367 = vmul.f32 %v254, %v351
  %v368 = vmul.f32 %v255, %v352
  %v369 = vmul.f32 %v256, %v353
  %v370 = vmul.f32 %v257, %v354
  %v371 = vmul.f32 %v258, %v355
  %v372 = vmul.f32 %v259, %v356
  %v373 = vmul.f32 %v260, %v357
  %v374 = vmul.f32 %v261, %v358
  %v375 = vmul.f32 %v262, %v359
  %v376 = vmul.f32 %v263, %v360
  %v377 = vmul.f32 %v264, %v361
  %v378 = vmul.f32 %v265, %v362
  %v379 = vmul.f32 %v266, %v363
  %v380 = vmul.f32 %v267, %v364
  %v381 = vmul.f32 %v268, %v365
  %v382 = vmul.f32 %v269, %v366
  %s383 = sld [smem:[#allocation2]]
  %v384 = vstv %s383
  %v385 = vmul.f32 %v384, %v367
  %v386 = vmul.f32 %v384, %v368
  %v387 = vmul.f32 %v384, %v369
  %v388 = vmul.f32 %v384, %v370
  %v389 = vmul.f32 %v384, %v371
  %v390 = vmul.f32 %v384, %v372
  %v391 = vmul.f32 %v384, %v373
  %v392 = vmul.f32 %v384, %v374
  %v393 = vmul.f32 %v384, %v375
  %v394 = vmul.f32 %v384, %v376
  %v395 = vmul.f32 %v384, %v377
  %v396 = vmul.f32 %v384, %v378
  %v397 = vmul.f32 %v384, %v379
  %v398 = vmul.f32 %v384, %v380
  %v399 = vmul.f32 %v384, %v381
  %v400 = vmul.f32 %v384, %v382
  %v401 = vpack.c.bf16 %v386, %v385
  %v402 = vpack.c.bf16 %v388, %v387
  %v403 = vpack.c.bf16 %v390, %v389
  %v404 = vpack.c.bf16 %v392, %v391
  %v405 = vpack.c.bf16 %v394, %v393
  %v406 = vpack.c.bf16 %v396, %v395
  %v407 = vpack.c.bf16 %v398, %v397
  %v408 = vpack.c.bf16 %v400, %v399
  %v417 = vunpack.c.l.b16 %v401
  %v418 = vunpack.c.h.b16 %v401
  %v419 = vunpack.c.l.b16 %v402
  %v420 = vunpack.c.h.b16 %v402
  %v421 = vunpack.c.l.b16 %v403
  %v422 = vunpack.c.h.b16 %v403
  %v423 = vunpack.c.l.b16 %v404
  %v424 = vunpack.c.h.b16 %v404
  %v425 = vunpack.c.l.b16 %v405
  %v426 = vunpack.c.h.b16 %v405
  %v427 = vunpack.c.l.b16 %v406
  %v428 = vunpack.c.h.b16 %v406
  %v429 = vunpack.c.l.b16 %v407
  %v430 = vunpack.c.h.b16 %v407
  %v431 = vunpack.c.l.b16 %v408
  %v432 = vunpack.c.h.b16 %v408
  %v433 = vpack.c.b16 %v417, %v417
  %v434 = vpack.c.b16 %v418, %v418
  %v435 = vpack.c.b16 %v419, %v419
  %v436 = vpack.c.b16 %v420, %v420
  %v437 = vpack.c.b16 %v421, %v421
  %v438 = vpack.c.b16 %v422, %v422
  %v439 = vpack.c.b16 %v423, %v423
  %v440 = vpack.c.b16 %v424, %v424
  %v441 = vpack.c.b16 %v425, %v425
  %v442 = vpack.c.b16 %v426, %v426
  %v443 = vpack.c.b16 %v427, %v427
  %v444 = vpack.c.b16 %v428, %v428
  %v445 = vpack.c.b16 %v429, %v429
  %v446 = vpack.c.b16 %v430, %v430
  %v447 = vpack.c.b16 %v431, %v431
  %v448 = vpack.c.b16 %v432, %v432
  %vm465 = vcmask 257024
  %466 = vst.msk [vmem:[%s4] sm:$0xf] %vm465, %v433
  %467 = vst.msk [vmem:[%s4 + $0x4] sm:$0xf] %vm465, %v434
  %468 = vst.msk [vmem:[%s4 + $0x8] sm:$0xf] %vm465, %v435
  %469 = vst.msk [vmem:[%s4 + $0xc] sm:$0xf] %vm465, %v436
  %470 = vst.msk [vmem:[%s4 + $0x10] sm:$0xf] %vm465, %v437
  %471 = vst.msk [vmem:[%s4 + $0x14] sm:$0xf] %vm465, %v438
  %472 = vst.msk [vmem:[%s4 + $0x18] sm:$0xf] %vm465, %v439
  %473 = vst.msk [vmem:[%s4 + $0x1c] sm:$0xf] %vm465, %v440
  %474 = vst.msk [vmem:[%s4 + $0x20] sm:$0xf] %vm465, %v441
  %475 = vst.msk [vmem:[%s4 + $0x24] sm:$0xf] %vm465, %v442
  %476 = vst.msk [vmem:[%s4 + $0x28] sm:$0xf] %vm465, %v443
  %477 = vst.msk [vmem:[%s4 + $0x2c] sm:$0xf] %vm465, %v444
  %478 = vst.msk [vmem:[%s4 + $0x30] sm:$0xf] %vm465, %v445
  %479 = vst.msk [vmem:[%s4 + $0x34] sm:$0xf] %vm465, %v446
  %480 = vst.msk [vmem:[%s4 + $0x38] sm:$0xf] %vm465, %v447
  %481 = vst.msk [vmem:[%s4 + $0x3c] sm:$0xf] %vm465, %v448
  %v482 = vpack.c.bf16 %v368, %v367
  %v483 = vpack.c.bf16 %v370, %v369
  %v484 = vpack.c.bf16 %v372, %v371
  %v485 = vpack.c.bf16 %v374, %v373
  %v486 = vpack.c.bf16 %v376, %v375
  %v487 = vpack.c.bf16 %v378, %v377
  %v488 = vpack.c.bf16 %v380, %v379
  %v489 = vpack.c.bf16 %v382, %v381
  %v498 = vunpack.c.l.b16 %v482
  %v499 = vunpack.c.h.b16 %v482
  %v500 = vunpack.c.l.b16 %v483
  %v501 = vunpack.c.h.b16 %v483
  %v502 = vunpack.c.l.b16 %v484
  %v503 = vunpack.c.h.b16 %v484
  %v504 = vunpack.c.l.b16 %v485
  %v505 = vunpack.c.h.b16 %v485
  %v506 = vunpack.c.l.b16 %v486
  %v507 = vunpack.c.h.b16 %v486
  %v508 = vunpack.c.l.b16 %v487
  %v509 = vunpack.c.h.b16 %v487
  %v510 = vunpack.c.l.b16 %v488
  %v511 = vunpack.c.h.b16 %v488
  %v512 = vunpack.c.l.b16 %v489
  %v513 = vunpack.c.h.b16 %v489
  %v514 = vpack.c.b16 %v498, %v498
  %v515 = vpack.c.b16 %v499, %v499
  %v516 = vpack.c.b16 %v500, %v500
  %v517 = vpack.c.b16 %v501, %v501
  %v518 = vpack.c.b16 %v502, %v502
  %v519 = vpack.c.b16 %v503, %v503
  %v520 = vpack.c.b16 %v504, %v504
  %v521 = vpack.c.b16 %v505, %v505
  %v522 = vpack.c.b16 %v506, %v506
  %v523 = vpack.c.b16 %v507, %v507
  %v524 = vpack.c.b16 %v508, %v508
  %v525 = vpack.c.b16 %v509, %v509
  %v526 = vpack.c.b16 %v510, %v510
  %v527 = vpack.c.b16 %v511, %v511
  %v528 = vpack.c.b16 %v512, %v512
  %v529 = vpack.c.b16 %v513, %v513
  %546 = vst.msk [vmem:[%s5] sm:$0xf] %vm465, %v514
  %547 = vst.msk [vmem:[%s5 + $0x4] sm:$0xf] %vm465, %v515
  %548 = vst.msk [vmem:[%s5 + $0x8] sm:$0xf] %vm465, %v516
  %549 = vst.msk [vmem:[%s5 + $0xc] sm:$0xf] %vm465, %v517
  %550 = vst.msk [vmem:[%s5 + $0x10] sm:$0xf] %vm465, %v518
  %551 = vst.msk [vmem:[%s5 + $0x14] sm:$0xf] %vm465, %v519
  %552 = vst.msk [vmem:[%s5 + $0x18] sm:$0xf] %vm465, %v520
  %553 = vst.msk [vmem:[%s5 + $0x1c] sm:$0xf] %vm465, %v521
  %554 = vst.msk [vmem:[%s5 + $0x20] sm:$0xf] %vm465, %v522
  %555 = vst.msk [vmem:[%s5 + $0x24] sm:$0xf] %vm465, %v523
  %556 = vst.msk [vmem:[%s5 + $0x28] sm:$0xf] %vm465, %v524
  %557 = vst.msk [vmem:[%s5 + $0x2c] sm:$0xf] %vm465, %v525
  %558 = vst.msk [vmem:[%s5 + $0x30] sm:$0xf] %vm465, %v526
  %559 = vst.msk [vmem:[%s5 + $0x34] sm:$0xf] %vm465, %v527
  %560 = vst.msk [vmem:[%s5 + $0x38] sm:$0xf] %vm465, %v528
  %561 = vst.msk [vmem:[%s5 + $0x3c] sm:$0xf] %vm465, %v529
  %v562 = vpack.c.bf16 %v255, %v254
  %v563 = vpack.c.bf16 %v257, %v256
  %v564 = vpack.c.bf16 %v259, %v258
  %v565 = vpack.c.bf16 %v261, %v260
  %v566 = vpack.c.bf16 %v263, %v262
  %v567 = vpack.c.bf16 %v265, %v264
  %v568 = vpack.c.bf16 %v267, %v266
  %v569 = vpack.c.bf16 %v269, %v268
  %v578 = vunpack.c.l.b16 %v562
  %v579 = vunpack.c.h.b16 %v562
  %v580 = vunpack.c.l.b16 %v563
  %v581 = vunpack.c.h.b16 %v563
  %v582 = vunpack.c.l.b16 %v564
  %v583 = vunpack.c.h.b16 %v564
  %v584 = vunpack.c.l.b16 %v565
  %v585 = vunpack.c.h.b16 %v565
  %v586 = vunpack.c.l.b16 %v566
  %v587 = vunpack.c.h.b16 %v566
  %v588 = vunpack.c.l.b16 %v567
  %v589 = vunpack.c.h.b16 %v567
  %v590 = vunpack.c.l.b16 %v568
  %v591 = vunpack.c.h.b16 %v568
  %v592 = vunpack.c.l.b16 %v569
  %v593 = vunpack.c.h.b16 %v569
  %v594 = vpack.c.b16 %v578, %v578
  %v595 = vpack.c.b16 %v579, %v579
  %v596 = vpack.c.b16 %v580, %v580
  %v597 = vpack.c.b16 %v581, %v581
  %v598 = vpack.c.b16 %v582, %v582
  %v599 = vpack.c.b16 %v583, %v583
  %v600 = vpack.c.b16 %v584, %v584
  %v601 = vpack.c.b16 %v585, %v585
  %v602 = vpack.c.b16 %v586, %v586
  %v603 = vpack.c.b16 %v587, %v587
  %v604 = vpack.c.b16 %v588, %v588
  %v605 = vpack.c.b16 %v589, %v589
  %v606 = vpack.c.b16 %v590, %v590
  %v607 = vpack.c.b16 %v591, %v591
  %v608 = vpack.c.b16 %v592, %v592
  %v609 = vpack.c.b16 %v593, %v593
  %626 = vst.msk [vmem:[%s6] sm:$0xf] %vm465, %v594
  %627 = vst.msk [vmem:[%s6 + $0x4] sm:$0xf] %vm465, %v595
  %628 = vst.msk [vmem:[%s6 + $0x8] sm:$0xf] %vm465, %v596
  %629 = vst.msk [vmem:[%s6 + $0xc] sm:$0xf] %vm465, %v597
  %630 = vst.msk [vmem:[%s6 + $0x10] sm:$0xf] %vm465, %v598
  %631 = vst.msk [vmem:[%s6 + $0x14] sm:$0xf] %vm465, %v599
  %632 = vst.msk [vmem:[%s6 + $0x18] sm:$0xf] %vm465, %v600
  %633 = vst.msk [vmem:[%s6 + $0x1c] sm:$0xf] %vm465, %v601
  %634 = vst.msk [vmem:[%s6 + $0x20] sm:$0xf] %vm465, %v602
  %635 = vst.msk [vmem:[%s6 + $0x24] sm:$0xf] %vm465, %v603
  %636 = vst.msk [vmem:[%s6 + $0x28] sm:$0xf] %vm465, %v604
  %637 = vst.msk [vmem:[%s6 + $0x2c] sm:$0xf] %vm465, %v605
  %638 = vst.msk [vmem:[%s6 + $0x30] sm:$0xf] %vm465, %v606
  %639 = vst.msk [vmem:[%s6 + $0x34] sm:$0xf] %vm465, %v607
  %640 = vst.msk [vmem:[%s6 + $0x38] sm:$0xf] %vm465, %v608
  %641 = vst.msk [vmem:[%s6 + $0x3c] sm:$0xf] %vm465, %v609
  // Predicated region
  $region18: #{tpu_custom_call.1} parent=0 // pred_check
    _
  $region19: #{tpu_custom_call.1} parent=0 // pred_check_branch
    %643 = sbr.rel (0) target = $region21
  $region20: #{tpu_custom_call.1} parent=0 // pred_region
    _
  $region21: #{tpu_custom_call.1} parent=0 // pred_fallthru
    _
  // Predicated region
  $region22: #{tpu_custom_call.1} parent=0 // pred_check
    _
  $region23: #{tpu_custom_call.1} parent=0 // pred_check_branch
    %645 = sbr.rel (0) target = $region25
  $region24: #{tpu_custom_call.1} parent=0 // pred_region
    _
  $region25: #{tpu_custom_call.1} parent=0 // pred_fallthru
    _
  // Predicated region
  $region26: #{tpu_custom_call.1} parent=0 // pred_check
    _
  $region27: #{tpu_custom_call.1} parent=0 // pred_check_branch
    %647 = sbr.rel (0) target = $region29
  $region28: #{tpu_custom_call.1} parent=0 // pred_region
    _
  $region29: #{tpu_custom_call.1} parent=0 // pred_fallthru
    _
  // Predicated region
  $region30: #{tpu_custom_call.1} parent=0 // pred_check
    _
  $region31: #{tpu_custom_call.1} parent=0 // pred_check_branch
    %649 = sbr.rel (0) target = $region33
  $region32: #{tpu_custom_call.1} parent=0 // pred_region
    _
  $region33: #{tpu_custom_call.1} parent=0 // pred_fallthru
    _
  // Predicated region
  $region34: #{tpu_custom_call.1} parent=0 // pred_check
    _
  $region35: #{tpu_custom_call.1} parent=0 // pred_check_branch
    %651 = sbr.rel (0) target = $region37
  $region36: #{tpu_custom_call.1} parent=0 // pred_region
    _
  $region37: #{tpu_custom_call.1} parent=0 // pred_fallthru
    _
  // Predicated region
  $region38: #{tpu_custom_call.1} parent=0 // pred_check
    _
  $region39: #{tpu_custom_call.1} parent=0 // pred_check_branch
    %653 = sbr.rel (0) target = $region41
  $region40: #{tpu_custom_call.1} parent=0 // pred_region
    _
  $region41: #{tpu_custom_call.1} parent=0 // pred_fallthru
    _

</llo_original>
